<compile_context>
chip_gen: v7x
topology: tpu7x:2x2x1
jax: 0.10.0
libtpu: 0.0.40
codegen_flags: <defaults>
</compile_context>

<pallas_src>
from functools import partial

import jax
import jax.numpy as jnp
from jax.experimental import pallas as pl
from jax.experimental.pallas import tpu as pltpu

LANE = 128  # TPU lane width


def mlp_kernel(x_ref, w1_ref, b1_ref, w2_ref, b2_ref, w3_ref, b3_ref, o_ref):
    # Three MXU matmuls with f32 accumulation; bias add + tanh on VPU/EUP.
    # Single invocation, no grid: everything is already resident in VMEM.
    x = x_ref[...]
    h1 = jnp.tanh(
        jnp.dot(x, w1_ref[...], preferred_element_type=jnp.float32) + b1_ref[...]
    )
    h2 = jnp.tanh(
        jnp.dot(h1, w2_ref[...], preferred_element_type=jnp.float32) + b2_ref[...]
    )
    out = jnp.dot(h2, w3_ref[...], preferred_element_type=jnp.float32) + b3_ref[...]
    o_ref[...] = out.astype(o_ref.dtype)


@partial(jax.jit, static_argnames=())
def simple_nn_forward(x, params):
    """x: [B, input_size] f32; params: dict of transposed weights / biases."""
    w1, b1 = params["w1"], params["b1"]   # [I, H], [1, H]
    w2, b2 = params["w2"], params["b2"]   # [H, H], [1, H]
    w3, b3 = params["w3"], params["b3"]   # [H, O], [1, O]
    B, I = x.shape
    H = w1.shape[1]
    O = w3.shape[1]

    # Pad the final output dimension to a full lane width (128) so the output
    # store is lane-dense (unmasked vst, no vst.msk tail). Padded columns are
    # exact zeros (zero weights + zero bias) and are sliced off below; under
    # jit these pads/slices fuse into the surrounding XLA program.
    O_pad = max(LANE, ((O + LANE - 1) // LANE) * LANE)
    w3p = jnp.pad(w3, ((0, 0), (0, O_pad - O)))
    b3p = jnp.pad(b3, ((0, 0), (0, O_pad - O)))

    flops = 2 * B * (I * H + H * H + H * O_pad)
    transcendentals = 2 * B * H  # two tanh layers
    bytes_accessed = 4 * (
        x.size + w1.size + b1.size + w2.size + b2.size + w3p.size + b3p.size
        + B * O_pad
    )

    vmem_spec = pl.BlockSpec(memory_space=pltpu.MemorySpace.VMEM)

    out_padded = pl.pallas_call(
        mlp_kernel,
        out_shape=jax.ShapeDtypeStruct((B, O_pad), jnp.float32),
        in_specs=[vmem_spec] * 7,
        out_specs=vmem_spec,
        cost_estimate=pl.CostEstimate(
            flops=flops,
            transcendentals=transcendentals,
            bytes_accessed=bytes_accessed,
        ),
    )(x, w1, b1, w2, b2, w3p, b3p)

    return out_padded[:, :O]


def init_params(key, input_size, hidden_size, output_size):
    """Deterministic init mimicking nn.Linear's uniform(-1/sqrt(fan_in), 1/sqrt(fan_in)).
    Weights are stored transposed: [in_features, out_features]."""
    ks = jax.random.split(key, 6)

    def linear(kw, kb, fan_in, fan_out):
        bound = 1.0 / jnp.sqrt(jnp.float32(fan_in))
        w = jax.random.uniform(kw, (fan_in, fan_out), jnp.float32, -bound, bound)
        b = jax.random.uniform(kb, (1, fan_out), jnp.float32, -bound, bound)
        return w, b

    w1, b1 = linear(ks[0], ks[1], input_size, hidden_size)
    w2, b2 = linear(ks[2], ks[3], hidden_size, hidden_size)
    w3, b3 = linear(ks[4], ks[5], hidden_size, output_size)
    return {"w1": w1, "b1": b1, "w2": w2, "b2": b2, "w3": w3, "b3": b3}


def reference_forward(x, p):
    h = jnp.tanh(x @ p["w1"] + p["b1"])
    h = jnp.tanh(h @ p["w2"] + p["b2"])
    return h @ p["w3"] + p["b3"]


if __name__ == "__main__":
    key = jax.random.PRNGKey(0)
    k_param, k_x = jax.random.split(key)

    batch, input_size, hidden_size, output_size = 16, 32, 64, 8
    params = init_params(k_param, input_size, hidden_size, output_size)
    x = jax.random.normal(k_x, (batch, input_size), jnp.float32)

    out = simple_nn_forward(x, params)
    out = jax.block_until_ready(out)

    ref = reference_forward(x, params)
    assert out.shape == (batch, output_size)
    assert jnp.allclose(out, ref, atol=1e-5, rtol=1e-5), "mismatch vs JAX reference"

    print("KERNEL_OK")
</pallas_src>

<mosaic_0001>
module attributes {stable_mosaic.version = 11 : i64} {
  func.func @mlp_kernel(%arg0: memref<16x32xf32, #tpu.memory_space<vmem>>, %arg1: memref<32x64xf32, #tpu.memory_space<vmem>>, %arg2: memref<1x64xf32, #tpu.memory_space<vmem>>, %arg3: memref<64x64xf32, #tpu.memory_space<vmem>>, %arg4: memref<1x64xf32, #tpu.memory_space<vmem>>, %arg5: memref<64x128xf32, #tpu.memory_space<vmem>>, %arg6: memref<1x128xf32, #tpu.memory_space<vmem>>, %arg7: memref<16x128xf32, #tpu.memory_space<vmem>>) attributes {dimension_semantics = [], scalar_prefetch = 0 : i64, scratch_operands = 0 : i64, tpu.core_type = #tpu.core_type<tc>} {
    %c0 = arith.constant 0 : index
    %c0_0 = arith.constant 0 : index
    %0 = vector.load %arg0[%c0, %c0_0] : memref<16x32xf32, #tpu.memory_space<vmem>>, vector<16x32xf32>
    %c0_1 = arith.constant 0 : index
    %c0_2 = arith.constant 0 : index
    %1 = vector.load %arg1[%c0_1, %c0_2] : memref<32x64xf32, #tpu.memory_space<vmem>>, vector<32x64xf32>
    %cst = arith.constant dense<0.000000e+00> : vector<16x64xf32>
    %2 = tpu.matmul %0, %1, %cst {dimension_numbers = #tpu.dot_dimension_numbers<[1], [0], [0], [1], [0, 0, 1, 1], [], []>} : vector<16x32xf32>, vector<32x64xf32>, vector<16x64xf32> -> vector<16x64xf32>
    %c0_3 = arith.constant 0 : index
    %c0_4 = arith.constant 0 : index
    %3 = vector.load %arg2[%c0_3, %c0_4] : memref<1x64xf32, #tpu.memory_space<vmem>>, vector<1x64xf32>
    %4 = vector.broadcast %3 : vector<1x64xf32> to vector<16x64xf32>
    %5 = arith.addf %2, %4 : vector<16x64xf32>
    %6 = math.tanh %5 : vector<16x64xf32>
    %c0_5 = arith.constant 0 : index
    %c0_6 = arith.constant 0 : index
    %7 = vector.load %arg3[%c0_5, %c0_6] : memref<64x64xf32, #tpu.memory_space<vmem>>, vector<64x64xf32>
    %cst_7 = arith.constant dense<0.000000e+00> : vector<16x64xf32>
    %8 = tpu.matmul %6, %7, %cst_7 {dimension_numbers = #tpu.dot_dimension_numbers<[1], [0], [0], [1], [0, 0, 1, 1], [], []>} : vector<16x64xf32>, vector<64x64xf32>, vector<16x64xf32> -> vector<16x64xf32>
    %c0_8 = arith.constant 0 : index
    %c0_9 = arith.constant 0 : index
    %9 = vector.load %arg4[%c0_8, %c0_9] : memref<1x64xf32, #tpu.memory_space<vmem>>, vector<1x64xf32>
    %10 = vector.broadcast %9 : vector<1x64xf32> to vector<16x64xf32>
    %11 = arith.addf %8, %10 : vector<16x64xf32>
    %12 = math.tanh %11 : vector<16x64xf32>
    %c0_10 = arith.constant 0 : index
    %c0_11 = arith.constant 0 : index
    %13 = vector.load %arg5[%c0_10, %c0_11] : memref<64x128xf32, #tpu.memory_space<vmem>>, vector<64x128xf32>
    %cst_12 = arith.constant dense<0.000000e+00> : vector<16x128xf32>
    %14 = tpu.matmul %12, %13, %cst_12 {dimension_numbers = #tpu.dot_dimension_numbers<[1], [0], [0], [1], [0, 0, 1, 1], [], []>} : vector<16x64xf32>, vector<64x128xf32>, vector<16x128xf32> -> vector<16x128xf32>
    %c0_13 = arith.constant 0 : index
    %c0_14 = arith.constant 0 : index
    %15 = vector.load %arg6[%c0_13, %c0_14] : memref<1x128xf32, #tpu.memory_space<vmem>>, vector<1x128xf32>
    %16 = vector.broadcast %15 : vector<1x128xf32> to vector<16x128xf32>
    %17 = arith.addf %14, %16 : vector<16x128xf32>
    %c0_15 = arith.constant 0 : index
    %c0_16 = arith.constant 0 : index
    %18 = vector.load %arg7[%c0_15, %c0_16] : memref<16x128xf32, #tpu.memory_space<vmem>>, vector<16x128xf32>
    tpu.vector_store %arg7[%c0_15, %c0_16], %17 {strides = array<i32>} : memref<16x128xf32, #tpu.memory_space<vmem>>, vector<16x128xf32>,
    return
  }
}

</mosaic_0001>

<llo_original>
// kernel: simple_nn_forward.1
$region0: #{simple_nn_forward.1}
  #allocation0 [shape = 'u32[]', space=smem, size = 0x4, offset = 0x4, fixed_abs, tag = 'smem constant byte address 0x4 - core index']
  #allocation1 [shape = 'u32[144,128]{1,0:T(1,128)}', space=vmem, size = 0x12000, scoped, tag = 'internal scratch']
  %s0 = inlined_call_operand.vmem [shape: f32[16,32], index: 0, kind: input, shape index: {}]
  %s1 = inlined_call_operand.vmem [shape: f32[32,64], index: 1, kind: input, shape index: {}]
  %s2 = inlined_call_operand.vmem [shape: f32[1,64], index: 2, kind: input, shape index: {}]
  %s3 = inlined_call_operand.vmem [shape: f32[64,64], index: 3, kind: input, shape index: {}]
  %s4 = inlined_call_operand.vmem [shape: f32[1,64], index: 4, kind: input, shape index: {}]
  %s5 = inlined_call_operand.vmem [shape: f32[64,128], index: 5, kind: input, shape index: {}]
  %s6 = inlined_call_operand.vmem [shape: f32[1,128], index: 6, kind: input, shape index: {}]
  %s7 = inlined_call_operand.vmem [shape: f32[16,128], index: 7, kind: output, shape index: {}]
  %s8 = sld [smem:[#allocation0]]
  $region38: #{simple_nn_forward.1} parent=0
    _
  %s10 = ssub.s32 1, %s8
  %s11 = scalar_select 0, %s10, %s8
  // Predicated region
  $region2: #{simple_nn_forward.1} parent=0 // pred_check
    _
  $region3: #{simple_nn_forward.1} parent=0 // pred_check_branch
    %13 = sbr.rel (0) target = $region5
  $region4: #{simple_nn_forward.1} parent=0 // pred_region
    _
  $region5: #{simple_nn_forward.1} parent=0 // pred_fallthru
    _
  // Predicated region
  $region6: #{simple_nn_forward.1} parent=0 // pred_check
    _
  $region7: #{simple_nn_forward.1} parent=0 // pred_check_branch
    %15 = sbr.rel (0) target = $region9
  $region8: #{simple_nn_forward.1} parent=0 // pred_region
    _
  $region9: #{simple_nn_forward.1} parent=0 // pred_fallthru
    _
  // Predicated region
  $region10: #{simple_nn_forward.1} parent=0 // pred_check
    _
  $region11: #{simple_nn_forward.1} parent=0 // pred_check_branch
    %17 = sbr.rel (0) target = $region13
  $region12: #{simple_nn_forward.1} parent=0 // pred_region
    _
  $region13: #{simple_nn_forward.1} parent=0 // pred_fallthru
    _
  // Predicated region
  $region14: #{simple_nn_forward.1} parent=0 // pred_check
    _
  $region15: #{simple_nn_forward.1} parent=0 // pred_check_branch
    %19 = sbr.rel (0) target = $region17
  $region16: #{simple_nn_forward.1} parent=0 // pred_region
    _
  $region17: #{simple_nn_forward.1} parent=0 // pred_fallthru
    _
  // Predicated region
  $region18: #{simple_nn_forward.1} parent=0 // pred_check
    _
  $region19: #{simple_nn_forward.1} parent=0 // pred_check_branch
    %21 = sbr.rel (0) target = $region21
  $region20: #{simple_nn_forward.1} parent=0 // pred_region
    _
  $region21: #{simple_nn_forward.1} parent=0 // pred_fallthru
    _
  // Predicated region
  $region22: #{simple_nn_forward.1} parent=0 // pred_check
    _
  $region23: #{simple_nn_forward.1} parent=0 // pred_check_branch
    %23 = sbr.rel (0) target = $region25
  $region24: #{simple_nn_forward.1} parent=0 // pred_region
    _
  $region25: #{simple_nn_forward.1} parent=0 // pred_fallthru
    _
  // Predicated region
  $region26: #{simple_nn_forward.1} parent=0 // pred_check
    _
  $region27: #{simple_nn_forward.1} parent=0 // pred_check_branch
    %25 = sbr.rel (0) target = $region29
  $region28: #{simple_nn_forward.1} parent=0 // pred_region
    _
  $region29: #{simple_nn_forward.1} parent=0 // pred_fallthru
    _
  %v26 = vld [vmem:[%s0] sm:$0xff]
  %v27 = vld [vmem:[%s0 + $0x8] sm:$0xff]
  %v28 = vld [vmem:[%s1] sm:$0xff]
  %v29 = vld [vmem:[%s1 + $0x8] sm:$0xff]
  %v30 = vld [vmem:[%s1 + $0x10] sm:$0xff]
  %v31 = vld [vmem:[%s1 + $0x18] sm:$0xff]
  %v32 = vld [vmem:[%s2] sm:$0x1]
  %v34 = vlaneseq
  %v35 = vshrl.u32 %v34, 7
  %v36 = vsub.s32 0, %v35
  %v37 = vrot.slane %v32, %v36
  %vm39 = vcmask 261120
  %v41 = vsel %vm39, %v26, 0
  %v44 = vsel %vm39, %v27, 0
  %46 = vmatprep.subr.mxu0 0.0
  %47 = vmatpush1.msra.mxu0 %v28
  %48 = vmatprep.subr.mxu0 0.0
  %49 = vmatpush1.msra.mxu0 %v29
  %50 = vmatprep.subr.mxu0 0.0
  %51 = vmatpush1.msra.mxu0 %v30
  %52 = vmatprep.subr.mxu0 0.0
  %53 = vmatpush1.msra.mxu0 %v31
  %54 = vmatprep.subr.mxu0 0.0
  %55 = vmatpush1.msra.mxu0 0.0
  %56 = vmatprep.subr.mxu0 0.0
  %57 = vmatpush1.msra.mxu0 0.0
  %58 = vmatprep.subr.mxu0 0.0
  %59 = vmatpush1.msra.mxu0 0.0
  %60 = vmatprep.subr.mxu0 0.0
  %61 = vmatpush1.msra.mxu0 0.0
  %62 = vmatprep.subr.mxu0 0.0
  %63 = vmatpush1.msra.mxu0 0.0
  %64 = vmatprep.subr.mxu0 0.0
  %65 = vmatpush1.msra.mxu0 0.0
  %66 = vmatprep.subr.mxu0 0.0
  %67 = vmatpush1.msra.mxu0 0.0
  %68 = vmatprep.subr.mxu0 0.0
  %69 = vmatpush1.msra.mxu0 0.0
  %70 = vmatprep.subr.mxu0 0.0
  %71 = vmatpush1.msra.mxu0 0.0
  %72 = vmatprep.subr.mxu0 0.0
  %73 = vmatpush1.msra.mxu0 0.0
  %74 = vmatprep.subr.mxu0 0.0
  %75 = vmatpush1.msra.mxu0 0.0
  %76 = vmatprep.subr.mxu0 0.0
  %77 = vmatpush1.msra.mxu0 0.0
  %78 = vmatprep.subr.mxu0 0.0
  %79 = vmatpush1.msra.mxu0 0.0
  %80 = vmatprep.subr.mxu0 0.0
  %81 = vmatpush1.msra.mxu0 0.0
  %82 = vmatprep.subr.mxu0 0.0
  %83 = vmatpush1.msra.mxu0 0.0
  %84 = vmatprep.subr.mxu0 0.0
  %85 = vmatpush1.msra.mxu0 0.0
  %86 = vmatprep.subr.mxu0 0.0
  %87 = vmatpush1.msra.mxu0 0.0
  %88 = vmatprep.subr.mxu0 0.0
  %89 = vmatpush1.msra.mxu0 0.0
  %90 = vmatprep.subr.mxu0 0.0
  %91 = vmatpush1.msra.mxu0 0.0
  %92 = vmatprep.subr.mxu0 0.0
  %93 = vmatpush1.msra.mxu0 0.0
  %94 = vmatprep.subr.mxu0 0.0
  %95 = vmatpush1.msra.mxu0 0.0
  %96 = vmatprep.subr.mxu0 0.0
  %97 = vmatpush1.msra.mxu0 0.0
  %98 = vmatprep.subr.mxu0 0.0
  %99 = vmatpush1.msra.mxu0 0.0
  %100 = vmatprep.subr.mxu0 0.0
  %101 = vmatpush1.msra.mxu0 0.0
  %102 = vmatprep.subr.mxu0 0.0
  %103 = vmatpush1.msra.mxu0 0.0
  %104 = vmatprep.subr.mxu0 0.0
  %105 = vmatpush1.msra.mxu0 0.0
  %106 = vmatprep.subr.mxu0 0.0
  %107 = vmatpush1.msra.mxu0 0.0
  %108 = vmatprep.subr.mxu0 0.0
  %109 = vmatpush1.msra.mxu0 0.0
  %110 = vmatprep.mubr.f32.mxu0 0.0
  %111 = vmatmul.mubr.f32.gmra.mrb[0].mxu0 %v41
  %v112 = vpop.f32.mrb[0].mxu0
  %v113 = vadd.f32 %v37, %v112
  %v114 = vpop.f32.mrb[0].mxu0
  %115 = vmatprep.mubr.f32.mxu0 0.0
  %116 = vmatmul.mubr.f32.gmra.mrb[0].mxu0 %v44
  %v117 = vpop.f32.mrb[0].mxu0
  %v118 = vadd.f32 %v37, %v117
  %v119 = vpop.f32.mrb[0].mxu0
  %120 = vdwg.mxu0
  %v121 = vtanh.pop %v113
  %v122 = vtanh.pop %v118
  %v123 = vld [vmem:[%s3] sm:$0xff]
  %v124 = vld [vmem:[%s3 + $0x8] sm:$0xff]
  %v125 = vld [vmem:[%s3 + $0x10] sm:$0xff]
  %v126 = vld [vmem:[%s3 + $0x18] sm:$0xff]
  %v127 = vld [vmem:[%s3 + $0x20] sm:$0xff]
  %v128 = vld [vmem:[%s3 + $0x28] sm:$0xff]
  %v129 = vld [vmem:[%s3 + $0x30] sm:$0xff]
  %v130 = vld [vmem:[%s3 + $0x38] sm:$0xff]
  %v131 = vld [vmem:[%s4] sm:$0x1]
  %v133 = vlaneseq
  %v134 = vshrl.u32 %v133, 7
  %v135 = vsub.s32 0, %v134
  %v136 = vrot.slane %v131, %v135
  %vm138 = vcmask 523264
  %v140 = vsel %vm138, %v121, 0
  %v143 = vsel %vm138, %v122, 0
  %145 = vmatprep.subr.mxu0 0.0
  %146 = vmatpush1.msra.mxu0 %v123
  %147 = vmatprep.subr.mxu0 0.0
  %148 = vmatpush1.msra.mxu0 %v124
  %149 = vmatprep.subr.mxu0 0.0
  %150 = vmatpush1.msra.mxu0 %v125
  %151 = vmatprep.subr.mxu0 0.0
  %152 = vmatpush1.msra.mxu0 %v126
  %153 = vmatprep.subr.mxu0 0.0
  %154 = vmatpush1.msra.mxu0 %v127
  %155 = vmatprep.subr.mxu0 0.0
  %156 = vmatpush1.msra.mxu0 %v128
  %157 = vmatprep.subr.mxu0 0.0
  %158 = vmatpush1.msra.mxu0 %v129
  %159 = vmatprep.subr.mxu0 0.0
  %160 = vmatpush1.msra.mxu0 %v130
  %161 = vmatprep.subr.mxu0 0.0
  %162 = vmatpush1.msra.mxu0 0.0
  %163 = vmatprep.subr.mxu0 0.0
  %164 = vmatpush1.msra.mxu0 0.0
  %165 = vmatprep.subr.mxu0 0.0
  %166 = vmatpush1.msra.mxu0 0.0
  %167 = vmatprep.subr.mxu0 0.0
  %168 = vmatpush1.msra.mxu0 0.0
  %169 = vmatprep.subr.mxu0 0.0
  %170 = vmatpush1.msra.mxu0 0.0
  %171 = vmatprep.subr.mxu0 0.0
  %172 = vmatpush1.msra.mxu0 0.0
  %173 = vmatprep.subr.mxu0 0.0
  %174 = vmatpush1.msra.mxu0 0.0
  %175 = vmatprep.subr.mxu0 0.0
  %176 = vmatpush1.msra.mxu0 0.0
  %177 = vmatprep.subr.mxu0 0.0
  %178 = vmatpush1.msra.mxu0 0.0
  %179 = vmatprep.subr.mxu0 0.0
  %180 = vmatpush1.msra.mxu0 0.0
  %181 = vmatprep.subr.mxu0 0.0
  %182 = vmatpush1.msra.mxu0 0.0
  %183 = vmatprep.subr.mxu0 0.0
  %184 = vmatpush1.msra.mxu0 0.0
  %185 = vmatprep.subr.mxu0 0.0
  %186 = vmatpush1.msra.mxu0 0.0
  %187 = vmatprep.subr.mxu0 0.0
  %188 = vmatpush1.msra.mxu0 0.0
  %189 = vmatprep.subr.mxu0 0.0
  %190 = vmatpush1.msra.mxu0 0.0
  %191 = vmatprep.subr.mxu0 0.0
  %192 = vmatpush1.msra.mxu0 0.0
  %193 = vmatprep.subr.mxu0 0.0
  %194 = vmatpush1.msra.mxu0 0.0
  %195 = vmatprep.subr.mxu0 0.0
  %196 = vmatpush1.msra.mxu0 0.0
  %197 = vmatprep.subr.mxu0 0.0
  %198 = vmatpush1.msra.mxu0 0.0
  %199 = vmatprep.subr.mxu0 0.0
  %200 = vmatpush1.msra.mxu0 0.0
  %201 = vmatprep.subr.mxu0 0.0
  %202 = vmatpush1.msra.mxu0 0.0
  %203 = vmatprep.subr.mxu0 0.0
  %204 = vmatpush1.msra.mxu0 0.0
  %205 = vmatprep.subr.mxu0 0.0
  %206 = vmatpush1.msra.mxu0 0.0
  %207 = vmatprep.subr.mxu0 0.0
  %208 = vmatpush1.msra.mxu0 0.0
  %209 = vmatprep.mubr.f32.mxu0 0.0
  %210 = vmatmul.mubr.f32.gmra.mrb[0].mxu0 %v140
  %v211 = vpop.f32.mrb[0].mxu0
  %v212 = vadd.f32 %v136, %v211
  %v213 = vpop.f32.mrb[0].mxu0
  %214 = vmatprep.mubr.f32.mxu0 0.0
  %215 = vmatmul.mubr.f32.gmra.mrb[0].mxu0 %v143
  %v216 = vpop.f32.mrb[0].mxu0
  %v217 = vadd.f32 %v136, %v216
  %v218 = vpop.f32.mrb[0].mxu0
  %219 = vdwg.mxu0
  %v220 = vtanh.pop %v212
  %v221 = vtanh.pop %v217
  %v222 = vld [vmem:[%s5] sm:$0xff]
  %v223 = vld [vmem:[%s5 + $0x8] sm:$0xff]
  %v224 = vld [vmem:[%s5 + $0x10] sm:$0xff]
  %v225 = vld [vmem:[%s5 + $0x18] sm:$0xff]
  %v226 = vld [vmem:[%s5 + $0x20] sm:$0xff]
  %v227 = vld [vmem:[%s5 + $0x28] sm:$0xff]
  %v228 = vld [vmem:[%s5 + $0x30] sm:$0xff]
  %v229 = vld [vmem:[%s5 + $0x38] sm:$0xff]
  %v230 = vld [vmem:[%s6] sm:$0x1]
  %v232 = vlaneseq
  %v233 = vshrl.u32 %v232, 7
  %v234 = vsub.s32 0, %v233
  %v235 = vrot.slane %v230, %v234
  %v238 = vsel %vm138, %v220, 0
  %v241 = vsel %vm138, %v221, 0
  %243 = vmatprep.subr.mxu0 0.0
  %244 = vmatpush1.msra.mxu0 %v222
  %245 = vmatprep.subr.mxu0 0.0
  %246 = vmatpush1.msra.mxu0 %v223
  %247 = vmatprep.subr.mxu0 0.0
  %248 = vmatpush1.msra.mxu0 %v224
  %249 = vmatprep.subr.mxu0 0.0
  %250 = vmatpush1.msra.mxu0 %v225
  %251 = vmatprep.subr.mxu0 0.0
  %252 = vmatpush1.msra.mxu0 %v226
  %253 = vmatprep.subr.mxu0 0.0
  %254 = vmatpush1.msra.mxu0 %v227
  %255 = vmatprep.subr.mxu0 0.0
  %256 = vmatpush1.msra.mxu0 %v228
  %257 = vmatprep.subr.mxu0 0.0
  %258 = vmatpush1.msra.mxu0 %v229
  %259 = vmatprep.subr.mxu0 0.0
  %260 = vmatpush1.msra.mxu0 0.0
  %261 = vmatprep.subr.mxu0 0.0
  %262 = vmatpush1.msra.mxu0 0.0
  %263 = vmatprep.subr.mxu0 0.0
  %264 = vmatpush1.msra.mxu0 0.0
  %265 = vmatprep.subr.mxu0 0.0
  %266 = vmatpush1.msra.mxu0 0.0
  %267 = vmatprep.subr.mxu0 0.0
  %268 = vmatpush1.msra.mxu0 0.0
  %269 = vmatprep.subr.mxu0 0.0
  %270 = vmatpush1.msra.mxu0 0.0
  %271 = vmatprep.subr.mxu0 0.0
  %272 = vmatpush1.msra.mxu0 0.0
  %273 = vmatprep.subr.mxu0 0.0
  %274 = vmatpush1.msra.mxu0 0.0
  %275 = vmatprep.subr.mxu0 0.0
  %276 = vmatpush1.msra.mxu0 0.0
  %277 = vmatprep.subr.mxu0 0.0
  %278 = vmatpush1.msra.mxu0 0.0
  %279 = vmatprep.subr.mxu0 0.0
  %280 = vmatpush1.msra.mxu0 0.0
  %281 = vmatprep.subr.mxu0 0.0
  %282 = vmatpush1.msra.mxu0 0.0
  %283 = vmatprep.subr.mxu0 0.0
  %284 = vmatpush1.msra.mxu0 0.0
  %285 = vmatprep.subr.mxu0 0.0
  %286 = vmatpush1.msra.mxu0 0.0
  %287 = vmatprep.subr.mxu0 0.0
  %288 = vmatpush1.msra.mxu0 0.0
  %289 = vmatprep.subr.mxu0 0.0
  %290 = vmatpush1.msra.mxu0 0.0
  %291 = vmatprep.subr.mxu0 0.0
  %292 = vmatpush1.msra.mxu0 0.0
  %293 = vmatprep.subr.mxu0 0.0
  %294 = vmatpush1.msra.mxu0 0.0
  %295 = vmatprep.subr.mxu0 0.0
  %296 = vmatpush1.msra.mxu0 0.0
  %297 = vmatprep.subr.mxu0 0.0
  %298 = vmatpush1.msra.mxu0 0.0
  %299 = vmatprep.subr.mxu0 0.0
  %300 = vmatpush1.msra.mxu0 0.0
  %301 = vmatprep.subr.mxu0 0.0
  %302 = vmatpush1.msra.mxu0 0.0
  %303 = vmatprep.subr.mxu0 0.0
  %304 = vmatpush1.msra.mxu0 0.0
  %305 = vmatprep.subr.mxu0 0.0
  %306 = vmatpush1.msra.mxu0 0.0
  %307 = vmatprep.mubr.f32.mxu0 0.0
  %308 = vmatmul.mubr.f32.gmra.mrb[0].mxu0 %v238
  %v309 = vpop.f32.mrb[0].mxu0
  %v310 = vadd.f32 %v235, %v309
  %v311 = vpop.f32.mrb[0].mxu0
  %312 = vmatprep.mubr.f32.mxu0 0.0
  %313 = vmatmul.mubr.f32.gmra.mrb[0].mxu0 %v241
  %v314 = vpop.f32.mrb[0].mxu0
  %v315 = vadd.f32 %v235, %v314
  %v316 = vpop.f32.mrb[0].mxu0
  %317 = vdwg.mxu0
  %318 = vst [vmem:[%s7] sm:$0xff] %v310
  %319 = vst [vmem:[%s7 + $0x8] sm:$0xff] %v315
  // Predicated region
  $region30: #{simple_nn_forward.1} parent=0 // pred_check
    _
  $region31: #{simple_nn_forward.1} parent=0 // pred_check_branch
    %321 = sbr.rel (0) target = $region33
  $region32: #{simple_nn_forward.1} parent=0 // pred_region
    _
  $region33: #{simple_nn_forward.1} parent=0 // pred_fallthru
    _
  // Predicated region
  $region34: #{simple_nn_forward.1} parent=0 // pred_check
    _
  $region35: #{simple_nn_forward.1} parent=0 // pred_check_branch
    %323 = sbr.rel (0) target = $region37
  $region36: #{simple_nn_forward.1} parent=0 // pred_region
    _
  $region37: #{simple_nn_forward.1} parent=0 // pred_fallthru
    _

</llo_original>
